<compile_context>
chip_gen: v5e
topology: v5e:2x2
jax: 0.10.0
libtpu: 0.0.40
codegen_flags: <defaults>
</compile_context>

<pallas_src>
import functools

import jax
import jax.numpy as jnp
from jax import lax
from jax.experimental import pallas as pl
from jax.experimental.pallas import tpu as pltpu


# Plain batched matmul (batch axis 0): (N, B, C) x (N, C, O) -> (N, B, O)
_BATCHED_MM = (((2,), (1,)), ((0,), (0,)))


# ----------------------------------------------------------------------------
# Kernel 1: supports matrix + node-adaptive params + batched graph propagation
# ----------------------------------------------------------------------------
def _prep_kernel(e_ref, pools_ref, x_ref, xg_ref, wg_ref, ww_ref, b_ref, *,
                 link_len, kch, cwh):
    f32 = jnp.float32
    e = e_ref[...]                                            # (N, D)
    # supports = softmax(relu(E @ E^T), axis=1); contract dim 1 of both
    # operands directly on the MXU (no vxpose of E).
    s = lax.dot_general(e, e, dimension_numbers=(((1,), (1,)), ((), ())),
                        preferred_element_type=f32)           # (N, N)
    s = jnp.maximum(s, 0.0)
    s = jnp.exp(s - jnp.max(s, axis=1, keepdims=True))
    a = s / jnp.sum(s, axis=1, keepdims=True)

    # Node-adaptive parameters: ONE lane-dense MXU matmul against the fused
    # [weights_pool | weights_window | bias_pool] slab, written out as three
    # separately-shaped outputs (wrapper reshapes are free minor-dim splits).
    p = jnp.dot(e, pools_ref[...], preferred_element_type=f32)  # (N, P)
    wg_ref[...] = p[:, :kch]
    ww_ref[...] = p[:, kch:kch + cwh]
    b_ref[...] = p[:, kch + cwh:]

    # Graph propagation batched over (B, C): K-1 wide (N,N)@(N,B*C) MXU
    # matmuls (A^0 = I is the input itself).  A stays resident in VMEM.
    cur = x_ref[...]                                          # (N, B*C)
    cols = [cur]
    for _ in range(1, link_len):
        cur = jnp.dot(a, cur, preferred_element_type=f32)
        cols.append(cur)
    xg_ref[...] = jnp.concatenate(cols, axis=-1)              # (N, K*B*C)


# ----------------------------------------------------------------------------
# Kernel 2: fused graph conv + window conv + CNN topo scaling + bias
# ----------------------------------------------------------------------------
def _main_kernel(t_ref, xg_ref, wg_ref, ww_ref, bias_ref, xw_ref, xp_ref,
                 cw_ref, cb_ref, fcw_ref, fcb_ref, out_ref, *,
                 link_len, window_len, conv_ch, height, width):
    f32 = jnp.float32

    # ---- graph branch: per-link batched-over-node MXU matmuls,
    #      (N,B,C) x (N,C,half) -> (N,B,half); no 4-D broadcast intermediate.
    xg = xg_ref[...]                                          # (N, K, B, C)
    wg = wg_ref[...]                                          # (N, K, C, half)
    x_gconv = lax.dot_general(xg[:, 0], wg[:, 0], _BATCHED_MM,
                              preferred_element_type=f32)     # (N, B, half)
    for k in range(1, link_len):
        x_gconv = x_gconv + lax.dot_general(
            xg[:, k], wg[:, k], _BATCHED_MM, preferred_element_type=f32)

    # ---- window branch: fold T over the leading window axis (free ref
    #      indexing), then one batched-over-node MXU matmul.
    xw_sum = t_ref[0] * xw_ref[0]                             # (N, B, Cw)
    for t in range(1, window_len):
        xw_sum = xw_sum + t_ref[t] * xw_ref[t]
    x_wconv = lax.dot_general(xw_sum, ww_ref[...], _BATCHED_MM,
                              preferred_element_type=f32)     # (N, B, half)

    # ---- CNN branch: 3x3 'same' conv as 9 scalar-weighted shifted adds on
    #      the VPU (no im2col), ReLU, global mean pool, tiny FC on the MXU.
    xp = xp_ref[...]                                          # (B, H+2, W+2)
    shifts = [xp[:, dh:dh + height, dw:dw + width]
              for dh in range(3) for dw in range(3)]          # 9 x (B, H, W)
    inv_hw = 1.0 / float(height * width)
    pooled_cols = []
    for c in range(conv_ch):
        acc = cw_ref[c * 9] * shifts[0]
        for i in range(1, 9):
            acc = acc + cw_ref[c * 9 + i] * shifts[i]
        act = jnp.maximum(acc + cb_ref[c], 0.0)               # (B, H, W)
        col = jnp.sum(jnp.sum(act, axis=2), axis=1, keepdims=True) * inv_hw
        pooled_cols.append(col)                               # (B, 1)
    pooled = jnp.concatenate(pooled_cols, axis=1)             # (B, conv_ch)
    topo = jnp.dot(pooled, fcw_ref[...],
                   preferred_element_type=f32) + fcb_ref[...]  # (B, half)

    # ---- topo scaling + concat + node bias (node-major layout; the wrapper
    #      transposes back to (B, N, dim_out) — pure layout plumbing).
    t3 = topo[None]                                           # (1, B, half)
    out = jnp.concatenate([x_gconv * t3, x_wconv * t3], axis=-1)
    out_ref[...] = out + bias_ref[...][:, None, :]            # (N, B, 2*half)


# ----------------------------------------------------------------------------
# Wrapper (only free reshapes + the one-time input transposes)
# ----------------------------------------------------------------------------
def tflsgcn_forward(params, x, x_window, node_embeddings, zigzag_pi, *,
                    link_len, window_len):
    assert link_len >= 2, "link_len must be >= 2 (support_set is [I, A, ...])"
    N, D = node_embeddings.shape
    B, _, C = x.shape
    Wl = x_window.shape[1]
    Cw = x_window.shape[3]
    half = params["weights_pool"].shape[-1]
    dim_out = 2 * half
    K = link_len
    kch = K * C * half
    cwh = Cw * half

    pools = jnp.concatenate(
        [params["weights_pool"].reshape(D, kch),
         params["weights_window"].reshape(D, cwh),
         params["bias_pool"]], axis=1)                        # (D, P) lane-dense

    # (N, B*C), b-major: A is applied to the whole batch in one wide matmul.
    x2d = jnp.transpose(x, (1, 0, 2)).reshape(N, B * C)

    xg2d, wg2d, ww2d, bias2d = pl.pallas_call(
        functools.partial(_prep_kernel, link_len=K, kch=kch, cwh=cwh),
        out_shape=(jax.ShapeDtypeStruct((N, K * B * C), jnp.float32),
                   jax.ShapeDtypeStruct((N, kch), jnp.float32),
                   jax.ShapeDtypeStruct((N, cwh), jnp.float32),
                   jax.ShapeDtypeStruct((N, dim_out), jnp.float32)),
    )(node_embeddings, pools, x2d)

    # Contiguous minor-dim splits only — free in XLA, no slicing copies.
    xg4 = xg2d.reshape(N, K, B, C)
    wg4 = wg2d.reshape(N, K, C, half)
    ww3 = ww2d.reshape(N, Cw, half)

    # Window data: t leading so the kernel uses leading-axis ref indexing,
    # node-leading inside so the contraction is batched over n.
    xw_t = jnp.transpose(x_window, (1, 2, 0, 3))              # (Wl, N, B, Cw)

    # Padded persistence image (no im2col: 9x less HBM traffic).
    H, Wd = zigzag_pi.shape[-2:]
    xp = jnp.pad(zigzag_pi[:, 0], ((0, 0), (1, 1), (1, 1)))   # (B, H+2, W+2)

    conv_ch = params["conv_w"].shape[0]
    cw_flat = params["conv_w"].reshape(conv_ch * 9)           # SMEM scalars
    fc_b2 = params["fc_b"][None, :]                           # (1, half)

    vmem = pl.BlockSpec(memory_space=pltpu.MemorySpace.VMEM)
    smem = pl.BlockSpec(memory_space=pltpu.MemorySpace.SMEM)

    out_nbo = pl.pallas_call(
        functools.partial(_main_kernel, link_len=K, window_len=Wl,
                          conv_ch=conv_ch, height=H, width=Wd),
        in_specs=[smem,           # T (scalars)
                  vmem, vmem,     # xg powers, graph weights
                  vmem, vmem,     # window weights, bias
                  vmem,           # x_window (t-leading)
                  vmem,           # padded PI
                  smem, smem,     # conv weights / bias (scalars)
                  vmem, vmem],    # fc weight / bias
        out_specs=vmem,
        out_shape=jax.ShapeDtypeStruct((N, B, dim_out), jnp.float32),
        compiler_params=pltpu.CompilerParams(
            vmem_limit_bytes=32 * 1024 * 1024),
    )(params["T"], xg4, wg4, ww3, bias2d, xw_t, xp,
      cw_flat, params["conv_b"], params["fc_w"], fc_b2)

    # Layout plumbing back to the module's (B, N, dim_out).
    return jnp.transpose(out_nbo, (1, 0, 2))


# ----------------------------------------------------------------------------
# Pure-JAX reference (same math as the PyTorch forward + CNN stand-in)
# ----------------------------------------------------------------------------
def reference_forward(params, x, x_window, node_embeddings, zigzag_pi, *, link_len):
    e = node_embeddings
    N = e.shape[0]
    supports = jax.nn.softmax(jax.nn.relu(e @ e.T), axis=1)
    sup_set = [jnp.eye(N, dtype=jnp.float32), supports]
    for k in range(2, link_len):
        sup_set.append(supports @ sup_set[k - 1])
    sup = jnp.stack(sup_set, axis=0)
    weights = jnp.einsum('nd,dkio->nkio', e, params['weights_pool'])
    bias = e @ params['bias_pool']
    x_g = jnp.einsum('knm,bmc->bknc', sup, x).transpose(0, 2, 1, 3)
    x_gconv = jnp.einsum('bnki,nkio->bno', x_g, weights)
    ww = jnp.einsum('nd,dio->nio', e, params['weights_window'])
    x_w = jnp.einsum('btni,nio->btno', x_window, ww).transpose(0, 2, 3, 1)
    x_wconv = x_w @ params['T']

    conv_w, conv_b = params['conv_w'], params['conv_b']
    fc_w, fc_b = params['fc_w'], params['fc_b']
    B, _, H, W = zigzag_pi.shape
    xp = jnp.pad(zigzag_pi[:, 0], ((0, 0), (1, 1), (1, 1)))
    pooled = []
    for c in range(conv_w.shape[0]):
        acc = jnp.zeros((B, H, W), jnp.float32)
        for dh in range(3):
            for dw in range(3):
                acc = acc + conv_w[c, 0, dh, dw] * xp[:, dh:dh + H, dw:dw + W]
        acc = jax.nn.relu(acc + conv_b[c])
        pooled.append(acc.mean(axis=(1, 2)))
    pooled = jnp.stack(pooled, axis=-1)
    topo = pooled @ fc_w + fc_b

    out = jnp.concatenate(
        [x_gconv * topo[:, None, :], x_wconv * topo[:, None, :]], axis=-1) + bias
    return out


# ----------------------------------------------------------------------------
if __name__ == "__main__":
    B, N = 2, 8
    dim_in, dim_out = 4, 16
    window_len, link_len, embed_dim = 3, 3, 8
    half = dim_out // 2
    Cw = 1 if (dim_in - 1) % 16 == 0 else dim_in // 2
    H = W = 16
    conv_ch = 4

    key = jax.random.PRNGKey(0)
    ks = jax.random.split(key, 12)
    params = dict(
        weights_pool=0.1 * jax.random.normal(ks[0], (embed_dim, link_len, dim_in, half), jnp.float32),
        weights_window=0.1 * jax.random.normal(ks[1], (embed_dim, Cw, half), jnp.float32),
        bias_pool=0.1 * jax.random.normal(ks[2], (embed_dim, dim_out), jnp.float32),
        T=jax.random.normal(ks[3], (window_len,), jnp.float32),
        conv_w=0.1 * jax.random.normal(ks[4], (conv_ch, 1, 3, 3), jnp.float32),
        conv_b=0.1 * jax.random.normal(ks[5], (conv_ch,), jnp.float32),
        fc_w=0.1 * jax.random.normal(ks[6], (conv_ch, half), jnp.float32),
        fc_b=0.1 * jax.random.normal(ks[7], (half,), jnp.float32),
    )
    x = jax.random.normal(ks[8], (B, N, dim_in), jnp.float32)
    x_window = jax.random.normal(ks[9], (B, window_len, N, Cw), jnp.float32)
    node_embeddings = jax.random.normal(ks[10], (N, embed_dim), jnp.float32)
    zigzag_pi = jax.random.uniform(ks[11], (B, 1, H, W), jnp.float32)

    out = tflsgcn_forward(params, x, x_window, node_embeddings, zigzag_pi,
                          link_len=link_len, window_len=window_len)
    out = jax.block_until_ready(out)

    ref = reference_forward(params, x, x_window, node_embeddings, zigzag_pi,
                            link_len=link_len)
    assert out.shape == (B, N, dim_out), out.shape
    max_err = float(jnp.max(jnp.abs(out - ref)))
    assert max_err < 1e-2, f"max abs error {max_err}"
    print("KERNEL_OK")
</pallas_src>

<mosaic_0001>
module attributes {stable_mosaic.version = 11 : i64} {
  func.func @_prep_kernel(%arg0: memref<8x8xf32, #tpu.memory_space<vmem>>, %arg1: memref<8x128xf32, #tpu.memory_space<vmem>>, %arg2: memref<8x8xf32, #tpu.memory_space<vmem>>, %arg3: memref<8x24xf32, #tpu.memory_space<vmem>>, %arg4: memref<8x96xf32, #tpu.memory_space<vmem>>, %arg5: memref<8x16xf32, #tpu.memory_space<vmem>>, %arg6: memref<8x16xf32, #tpu.memory_space<vmem>>) attributes {dimension_semantics = [], scalar_prefetch = 0 : i64, scratch_operands = 0 : i64, tpu.core_type = #tpu.core_type<tc>} {
    %c0 = arith.constant 0 : index
    %c0_0 = arith.constant 0 : index
    %0 = vector.load %arg0[%c0, %c0_0] : memref<8x8xf32, #tpu.memory_space<vmem>>, vector<8x8xf32>
    %cst = arith.constant dense<0.000000e+00> : vector<8x8xf32>
    %1 = tpu.matmul %0, %0, %cst {dimension_numbers = #tpu.dot_dimension_numbers<[1], [1], [0], [0], [0, 0, 1, 0], [], []>} : vector<8x8xf32>, vector<8x8xf32>, vector<8x8xf32> -> vector<8x8xf32>
    %cst_1 = arith.constant 0.000000e+00 : f32
    %2 = vector.broadcast %cst_1 : f32 to vector<8x8xf32>
    %3 = arith.maximumf %1, %2 : vector<8x8xf32>
    %cst_2 = arith.constant dense<0xFF800000> : vector<8xf32>
    %4 = vector.multi_reduction <maximumf>, %3, %cst_2 [1] : vector<8x8xf32> to vector<8xf32>
    %5 = vector.shape_cast %4 : vector<8xf32> to vector<8x1xf32>
    %6 = vector.broadcast %5 : vector<8x1xf32> to vector<8x8xf32>
    %7 = arith.subf %3, %6 : vector<8x8xf32>
    %8 = math.exp %7 : vector<8x8xf32>
    %cst_3 = arith.constant dense<0.000000e+00> : vector<8xf32>
    %9 = vector.multi_reduction <add>, %8, %cst_3 [1] : vector<8x8xf32> to vector<8xf32>
    %10 = vector.shape_cast %9 : vector<8xf32> to vector<8x1xf32>
    %11 = vector.broadcast %10 : vector<8x1xf32> to vector<8x8xf32>
    %12 = arith.divf %8, %11 : vector<8x8xf32>
    %c0_4 = arith.constant 0 : index
    %c0_5 = arith.constant 0 : index
    %13 = vector.load %arg1[%c0_4, %c0_5] : memref<8x128xf32, #tpu.memory_space<vmem>>, vector<8x128xf32>
    %cst_6 = arith.constant dense<0.000000e+00> : vector<8x128xf32>
    %14 = tpu.matmul %0, %13, %cst_6 {dimension_numbers = #tpu.dot_dimension_numbers<[1], [0], [0], [1], [0, 0, 1, 1], [], []>} : vector<8x8xf32>, vector<8x128xf32>, vector<8x128xf32> -> vector<8x128xf32>
    %15 = vector.extract_strided_slice %14 {offsets = [0, 0], sizes = [8, 96], strides = [1, 1]} : vector<8x128xf32> to vector<8x96xf32>
    %c0_7 = arith.constant 0 : index
    %c0_8 = arith.constant 0 : index
    %16 = vector.load %arg4[%c0_7, %c0_8] : memref<8x96xf32, #tpu.memory_space<vmem>>, vector<8x96xf32>
    tpu.vector_store %arg4[%c0_7, %c0_8], %15 {strides = array<i32>} : memref<8x96xf32, #tpu.memory_space<vmem>>, vector<8x96xf32>,
    %17 = vector.extract_strided_slice %14 {offsets = [0, 96], sizes = [8, 16], strides = [1, 1]} : vector<8x128xf32> to vector<8x16xf32>
    %c0_9 = arith.constant 0 : index
    %c0_10 = arith.constant 0 : index
    %18 = vector.load %arg5[%c0_9, %c0_10] : memref<8x16xf32, #tpu.memory_space<vmem>>, vector<8x16xf32>
    tpu.vector_store %arg5[%c0_9, %c0_10], %17 {strides = array<i32>} : memref<8x16xf32, #tpu.memory_space<vmem>>, vector<8x16xf32>,
    %19 = vector.extract_strided_slice %14 {offsets = [0, 112], sizes = [8, 16], strides = [1, 1]} : vector<8x128xf32> to vector<8x16xf32>
    %c0_11 = arith.constant 0 : index
    %c0_12 = arith.constant 0 : index
    %20 = vector.load %arg6[%c0_11, %c0_12] : memref<8x16xf32, #tpu.memory_space<vmem>>, vector<8x16xf32>
    tpu.vector_store %arg6[%c0_11, %c0_12], %19 {strides = array<i32>} : memref<8x16xf32, #tpu.memory_space<vmem>>, vector<8x16xf32>,
    %c0_13 = arith.constant 0 : index
    %c0_14 = arith.constant 0 : index
    %21 = vector.load %arg2[%c0_13, %c0_14] : memref<8x8xf32, #tpu.memory_space<vmem>>, vector<8x8xf32>
    %cst_15 = arith.constant dense<0.000000e+00> : vector<8x8xf32>
    %22 = tpu.matmul %12, %21, %cst_15 {dimension_numbers = #tpu.dot_dimension_numbers<[1], [0], [0], [1], [0, 0, 1, 1], [], []>} : vector<8x8xf32>, vector<8x8xf32>, vector<8x8xf32> -> vector<8x8xf32>
    %cst_16 = arith.constant dense<0.000000e+00> : vector<8x8xf32>
    %23 = tpu.matmul %12, %22, %cst_16 {dimension_numbers = #tpu.dot_dimension_numbers<[1], [0], [0], [1], [0, 0, 1, 1], [], []>} : vector<8x8xf32>, vector<8x8xf32>, vector<8x8xf32> -> vector<8x8xf32>
    %24 = tpu.concatenate %21, %22, %23 in 1 : vector<8x8xf32>, vector<8x8xf32>, vector<8x8xf32> -> vector<8x24xf32>
    %c0_17 = arith.constant 0 : index
    %c0_18 = arith.constant 0 : index
    %25 = vector.load %arg3[%c0_17, %c0_18] : memref<8x24xf32, #tpu.memory_space<vmem>>, vector<8x24xf32>
    tpu.vector_store %arg3[%c0_17, %c0_18], %24 {strides = array<i32>} : memref<8x24xf32, #tpu.memory_space<vmem>>, vector<8x24xf32>,
    return
  }
}

</mosaic_0001>

<llo_original>
// kernel: tpu_custom_call.1
$region0: #{tpu_custom_call.1}
  #allocation0 [shape = 'u32[]', space=smem, size = 0x4, offset = 0x4, fixed_abs, tag = 'smem constant byte address 0x4 - core index']
  #allocation1 [shape = 'u32[72,128]{1,0:T(1,128)}', space=vmem, size = 0x9000, scoped, tag = 'internal scratch']
  %s0 = inlined_call_operand.hbm [shape: f32[8,8], index: 0, kind: input, shape index: {}]
  %s1 = inlined_call_operand.hbm [shape: f32[8,128], index: 1, kind: input, shape index: {}]
  %s2 = inlined_call_operand.hbm [shape: f32[8,8], index: 2, kind: input, shape index: {}]
  %s3 = inlined_call_operand.hbm [shape: f32[8,24], index: 3, kind: output, shape index: {0}]
  %s4 = inlined_call_operand.hbm [shape: f32[8,96], index: 4, kind: output, shape index: {1}]
  %s5 = inlined_call_operand.hbm [shape: f32[8,16], index: 5, kind: output, shape index: {2}]
  %s6 = inlined_call_operand.hbm [shape: f32[8,16], index: 6, kind: output, shape index: {3}]
  %7 = xla_tuple %s3, %s4, %s5, %s6
  %s8 = sld [smem:[#allocation0]]
  $region58: #{tpu_custom_call.1} parent=0
    _
  %s10 = ssub.s32 1, %s8
  %s11 = scalar_select 0, %s10, %s8
  $region1: #{tpu_custom_call.1} parent=0
    #allocation2 [shape = 'u8[4096]{0}', space=vmem, size = 0x1000, scoped, tag = 'input window, operand 0, single buffered']
    #allocation3 [shape = 's32[1]{0}', space=sflag, size = 0x4, scoped, tag = 'scoped memory for tpu_custom_call.1']
    #allocation4 [shape = 's32[1]{0}', space=sflag, size = 0x4, scoped, tag = 'scoped memory for tpu_custom_call.1']
    #allocation5 [shape = 'u8[4096]{0}', space=vmem, size = 0x1000, scoped, tag = 'input window, operand 1, single buffered']
    #allocation6 [shape = 's32[1]{0}', space=sflag, size = 0x4, scoped, tag = 'scoped memory for tpu_custom_call.1']
    #allocation7 [shape = 'u8[4096]{0}', space=vmem, size = 0x1000, scoped, tag = 'input window, operand 2, single buffered']
    #allocation8 [shape = 'u8[4096]{0}', space=vmem, size = 0x1000, scoped, tag = 'output window, operand 0, single buffered']
    #allocation9 [shape = 'u8[4096]{0}', space=vmem, size = 0x1000, scoped, tag = 'output window, operand 1, single buffered']
    #allocation10 [shape = 's32[1]{0}', space=sflag, size = 0x4, scoped, tag = 'scoped memory for tpu_custom_call.1']
    #allocation11 [shape = 'u8[4096]{0}', space=vmem, size = 0x1000, scoped, tag = 'output window, operand 2, single buffered']
    #allocation12 [shape = 'u8[4096]{0}', space=vmem, size = 0x1000, scoped, tag = 'output window, operand 3, single buffered']
    #allocation13 [shape = 's32[1]{0}', space=sflag, size = 0x4, scoped, tag = 'scoped memory for tpu_custom_call.1']
    %12 = vsyncpa [#allocation3], 0
    %13 = vsyncpa [#allocation6], 0
    %14 = vsyncpa [#allocation4], 0
    %15 = vsyncpa [#allocation10], 0
    %16 = vsyncpa [#allocation13], 0
    // Predicated region
    $region2: #{tpu_custom_call.1} parent=1 // pred_check
      _
    $region3: #{tpu_custom_call.1} parent=1 // pred_check_branch
      %18 = sbr.rel (0) target = $region5
    $region4: #{tpu_custom_call.1} parent=1 // pred_region
      %20 = vsyncadd [#allocation3], 0
      %s22 = sshll.u32 %s0, 4
      %s23 = int_to_ptr.hbm [resolvable:$true] %s22
      %s24 = sshll.u32 [#allocation2], 4
      %s25 = int_to_ptr.vmem [resolvable:$true] %s24
      %27 = dma.hbm_to_vmem [thread:$0]  %s23, 128, %s25, [#allocation3]
    $region5: #{tpu_custom_call.1} parent=1 // pred_fallthru
      _
    // Predicated region
    $region6: #{tpu_custom_call.1} parent=1 // pred_check
      _
    $region7: #{tpu_custom_call.1} parent=1 // pred_check_branch
      %29 = sbr.rel (0) target = $region9
    $region8: #{tpu_custom_call.1} parent=1 // pred_region
      %31 = vsyncadd [#allocation6], 0
      %s33 = sshll.u32 %s1, 4
      %s34 = int_to_ptr.hbm [resolvable:$true] %s33
      %s35 = sshll.u32 [#allocation5], 4
      %s36 = int_to_ptr.vmem [resolvable:$true] %s35
      %38 = dma.hbm_to_vmem [thread:$0]  %s34, 128, %s36, [#allocation6]
    $region9: #{tpu_custom_call.1} parent=1 // pred_fallthru
      _
    // Predicated region
    $region10: #{tpu_custom_call.1} parent=1 // pred_check
      _
    $region11: #{tpu_custom_call.1} parent=1 // pred_check_branch
      %40 = sbr.rel (0) target = $region13
    $region12: #{tpu_custom_call.1} parent=1 // pred_region
      %42 = vsyncadd [#allocation6], 0
      %s44 = sshll.u32 %s2, 4
      %s45 = int_to_ptr.hbm [resolvable:$true] %s44
      %s46 = sshll.u32 [#allocation7], 4
      %s47 = int_to_ptr.vmem [resolvable:$true] %s46
      %49 = dma.hbm_to_vmem [thread:$0]  %s45, 128, %s47, [#allocation6]
    $region13: #{tpu_custom_call.1} parent=1 // pred_fallthru
      _
    // Predicated region
    $region14: #{tpu_custom_call.1} parent=1 // pred_check
      _
    $region15: #{tpu_custom_call.1} parent=1 // pred_check_branch
      %51 = sbr.rel (0) target = $region17
    $region16: #{tpu_custom_call.1} parent=1 // pred_region
      %53 = dma.done [#allocation3], 128
    $region17: #{tpu_custom_call.1} parent=1 // pred_fallthru
      _
    // Predicated region
    $region18: #{tpu_custom_call.1} parent=1 // pred_check
      _
    $region19: #{tpu_custom_call.1} parent=1 // pred_check_branch
      %55 = sbr.rel (0) target = $region21
    $region20: #{tpu_custom_call.1} parent=1 // pred_region
      %57 = dma.done [#allocation6], 128
    $region21: #{tpu_custom_call.1} parent=1 // pred_fallthru
      _
    // Predicated region
    $region22: #{tpu_custom_call.1} parent=1 // pred_check
      _
    $region23: #{tpu_custom_call.1} parent=1 // pred_check_branch
      %59 = sbr.rel (0) target = $region25
    $region24: #{tpu_custom_call.1} parent=1 // pred_region
      %61 = dma.done [#allocation6], 128
    $region25: #{tpu_custom_call.1} parent=1 // pred_fallthru
      _
    %v62 = vld [vmem:[#allocation2] sm:$0xff]
    %vm63 = vcmask 64512
    %v65 = vsel %vm63, %v62, 0
    %67 = vmatpush.xpose.msra.mxu0 0.0
    %68 = vmatpush.xpose.msra.mxu0 0.0
    %69 = vmatpush.xpose.msra.mxu0 0.0
    %70 = vmatpush.xpose.msra.mxu0 0.0
    %71 = vmatpush.xpose.msra.mxu0 0.0
    %72 = vmatpush.xpose.msra.mxu0 0.0
    %73 = vmatpush.xpose.msra.mxu0 0.0
    %74 = vmatpush.xpose.msra.mxu0 0.0
    %75 = vmatpush.xpose.msra.mxu0 0.0
    %76 = vmatpush.xpose.msra.mxu0 0.0
    %77 = vmatpush.xpose.msra.mxu0 0.0
    %78 = vmatpush.xpose.msra.mxu0 0.0
    %79 = vmatpush.xpose.msra.mxu0 0.0
    %80 = vmatpush.xpose.msra.mxu0 0.0
    %81 = vmatpush.xpose.msra.mxu0 0.0
    %82 = vmatpush.xpose.msra.mxu0 %v65
    %83 = vmatmul.f32.gmra.mxu0 %v65
    %v84 = vpop.f32.mrf.mxu0
    %v85 = vadd.f32 0.0, %v84
    %86 = vdwg.mxu0
    %v87 = vmax.f32 %v85, 0.0
    %v88 = vsel %vm63, %v87, -inf
    %89 = vmax.xlane.f32.xlu0 %v88
    %v90 = vpop.xlane.xlu0 %89
    %v91 = vsub.f32 %v87, %v90
    %v92 = vmul.f32 %v91, 1.442695
    %v93 = vpow.pop %v92
    %v94 = vsel %vm63, %v93, 0.0
    %95 = vadd.xlane.f32.xlu0 %v94
    %v96 = vpop.xlane.xlu0 %95
    %v97 = vrcp.pop %v96
    %v98 = vmul.f32 %v96, %v97
    %v99 = vsub.f32 1.0, %v98
    %v100 = vmul.f32 %v97, %v99
    %v101 = vadd.f32 %v97, %v100
    %vm102 = vweird.f32 %v96
    %vm103 = vweird.f32 %v97
    %vm104 = vmor %vm102, %vm103
    %v105 = vsel %vm104, %v97, %v101
    %v106 = vand.u32 2147483647, %v96
    %vm107 = vcmp.eq.f32.partialorder %v106, 8.507059e+37
    %v108 = vand.u32 %v96, 2147483648
    %v109 = vor.u32 1.1754944e-38, %v108
    %v110 = vsel %vm107, %v109, %v105
    %v111 = vmul.f32 %v93, %v110
    %v112 = vld [vmem:[#allocation5] sm:$0xff]
    %113 = vmatpush.msra.mxu0 0.0
    %114 = vmatpush.msra.mxu0 0.0
    %115 = vmatpush.msra.mxu0 0.0
    %116 = vmatpush.msra.mxu0 0.0
    %117 = vmatpush.msra.mxu0 0.0
    %118 = vmatpush.msra.mxu0 0.0
    %119 = vmatpush.msra.mxu0 0.0
    %120 = vmatpush.msra.mxu0 0.0
    %121 = vmatpush.msra.mxu0 0.0
    %122 = vmatpush.msra.mxu0 0.0
    %123 = vmatpush.msra.mxu0 0.0
    %124 = vmatpush.msra.mxu0 0.0
    %125 = vmatpush.msra.mxu0 0.0
    %126 = vmatpush.msra.mxu0 0.0
    %127 = vmatpush.msra.mxu0 0.0
    %128 = vmatpush.msra.mxu0 %v112
    %129 = vmatmul.f32.gmra.mxu0 %v65
    %v130 = vpop.f32.mrf.mxu0
    %v131 = vadd.f32 0.0, %v130
    %132 = vdwg.mxu0
    %vm133 = vcmask 785408
    %134 = vst.msk [vmem:[#allocation9] sm:$0xff] %vm133, %v131
    %136 = vrot.lane.b32.xlu0 %v131, 32
    %v137 = vpop.permute.xlu0 %136
    %vm139 = vcmask 130048
    %140 = vst.msk [vmem:[#allocation11] sm:$0xff] %vm139, %v137
    %141 = vrot.lane.b32.xlu0 %v131, 16
    %v142 = vpop.permute.xlu0 %141
    %144 = vst.msk [vmem:[#allocation12] sm:$0xff] %vm139, %v142
    %v145 = vld [vmem:[#allocation7] sm:$0xff]
    %v147 = vsel %vm63, %v111, 0
    %149 = vmatpush.msra.mxu0 0.0
    %150 = vmatpush.msra.mxu0 0.0
    %151 = vmatpush.msra.mxu0 0.0
    %152 = vmatpush.msra.mxu0 0.0
    %153 = vmatpush.msra.mxu0 0.0
    %154 = vmatpush.msra.mxu0 0.0
    %155 = vmatpush.msra.mxu0 0.0
    %156 = vmatpush.msra.mxu0 0.0
    %157 = vmatpush.msra.mxu0 0.0
    %158 = vmatpush.msra.mxu0 0.0
    %159 = vmatpush.msra.mxu0 0.0
    %160 = vmatpush.msra.mxu0 0.0
    %161 = vmatpush.msra.mxu0 0.0
    %162 = vmatpush.msra.mxu0 0.0
    %163 = vmatpush.msra.mxu0 0.0
    %164 = vmatpush.msra.mxu0 %v145
    %165 = vmatmul.f32.gmra.mxu0 %v147
    %v166 = vpop.f32.mrf.mxu0
    %v167 = vadd.f32 0.0, %v166
    %168 = vdwg.mxu0
    %169 = vmatpush.msra.mxu0 0.0
    %170 = vmatpush.msra.mxu0 0.0
    %171 = vmatpush.msra.mxu0 0.0
    %172 = vmatpush.msra.mxu0 0.0
    %173 = vmatpush.msra.mxu0 0.0
    %174 = vmatpush.msra.mxu0 0.0
    %175 = vmatpush.msra.mxu0 0.0
    %176 = vmatpush.msra.mxu0 0.0
    %177 = vmatpush.msra.mxu0 0.0
    %178 = vmatpush.msra.mxu0 0.0
    %179 = vmatpush.msra.mxu0 0.0
    %180 = vmatpush.msra.mxu0 0.0
    %181 = vmatpush.msra.mxu0 0.0
    %182 = vmatpush.msra.mxu0 0.0
    %183 = vmatpush.msra.mxu0 0.0
    %184 = vmatpush.msra.mxu0 %v167
    %185 = vmatmul.f32.gmra.mxu0 %v147
    %v186 = vpop.f32.mrf.mxu0
    %v187 = vadd.f32 0.0, %v186
    %188 = vdwg.mxu0
    %190 = vrot.lane.b32.xlu0 %v167, 8
    %v191 = vpop.permute.xlu0 %190
    %194 = vrot.lane.b32.xlu0 %v187, 16
    %v195 = vpop.permute.xlu0 %194
    %v197 = vsel %vm63, %v145, %v191
    %v198 = vsel %vm139, %v197, %v195
    %vm199 = vcmask 195584
    %200 = vst.msk [vmem:[#allocation8] sm:$0xff] %vm199, %v198
    // Predicated region
    $region26: #{tpu_custom_call.1} parent=1 // pred_check
      _
    $region27: #{tpu_custom_call.1} parent=1 // pred_check_branch
      %202 = sbr.rel (0) target = $region29
    $region28: #{tpu_custom_call.1} parent=1 // pred_region
      %204 = vsyncadd [#allocation4], 0
      %s206 = sshll.u32 [#allocation8], 4
      %s207 = int_to_ptr.vmem [resolvable:$true] %s206
      %s208 = sshll.u32 %s3, 4
      %s209 = int_to_ptr.hbm [resolvable:$true] %s208
      %211 = dma.vmem_to_hbm [thread:$0]  %s207, 128, %s209, [#allocation4]
    $region29: #{tpu_custom_call.1} parent=1 // pred_fallthru
      _
    // Predicated region
    $region30: #{tpu_custom_call.1} parent=1 // pred_check
      _
    $region31: #{tpu_custom_call.1} parent=1 // pred_check_branch
      %213 = sbr.rel (0) target = $region33
    $region32: #{tpu_custom_call.1} parent=1 // pred_region
      %215 = vsyncadd [#allocation10], 0
      %s217 = sshll.u32 [#allocation9], 4
      %s218 = int_to_ptr.vmem [resolvable:$true] %s217
      %s219 = sshll.u32 %s4, 4
      %s220 = int_to_ptr.hbm [resolvable:$true] %s219
      %222 = dma.vmem_to_hbm [thread:$0]  %s218, 128, %s220, [#allocation10]
    $region33: #{tpu_custom_call.1} parent=1 // pred_fallthru
      _
    // Predicated region
    $region34: #{tpu_custom_call.1} parent=1 // pred_check
      _
    $region35: #{tpu_custom_call.1} parent=1 // pred_check_branch
      %224 = sbr.rel (0) target = $region37
    $region36: #{tpu_custom_call.1} parent=1 // pred_region
      %226 = vsyncadd [#allocation10], 0
      %s228 = sshll.u32 [#allocation11], 4
      %s229 = int_to_ptr.vmem [resolvable:$true] %s228
      %s230 = sshll.u32 %s5, 4
      %s231 = int_to_ptr.hbm [resolvable:$true] %s230
      %233 = dma.vmem_to_hbm [thread:$0]  %s229, 128, %s231, [#allocation10]
    $region37: #{tpu_custom_call.1} parent=1 // pred_fallthru
      _
    // Predicated region
    $region38: #{tpu_custom_call.1} parent=1 // pred_check
      _
    $region39: #{tpu_custom_call.1} parent=1 // pred_check_branch
      %235 = sbr.rel (0) target = $region41
    $region40: #{tpu_custom_call.1} parent=1 // pred_region
      %237 = vsyncadd [#allocation13], 0
      %s239 = sshll.u32 [#allocation12], 4
      %s240 = int_to_ptr.vmem [resolvable:$true] %s239
      %s241 = sshll.u32 %s6, 4
      %s242 = int_to_ptr.hbm [resolvable:$true] %s241
      %244 = dma.vmem_to_hbm [thread:$0]  %s240, 128, %s242, [#allocation13]
    $region41: #{tpu_custom_call.1} parent=1 // pred_fallthru
      _
    // Predicated region
    $region42: #{tpu_custom_call.1} parent=1 // pred_check
      _
    $region43: #{tpu_custom_call.1} parent=1 // pred_check_branch
      %246 = sbr.rel (0) target = $region45
    $region44: #{tpu_custom_call.1} parent=1 // pred_region
      %248 = dma.done [#allocation4], 128
    $region45: #{tpu_custom_call.1} parent=1 // pred_fallthru
      _
    // Predicated region
    $region46: #{tpu_custom_call.1} parent=1 // pred_check
      _
    $region47: #{tpu_custom_call.1} parent=1 // pred_check_branch
      %250 = sbr.rel (0) target = $region49
    $region48: #{tpu_custom_call.1} parent=1 // pred_region
      %252 = dma.done [#allocation10], 128
    $region49: #{tpu_custom_call.1} parent=1 // pred_fallthru
      _
    // Predicated region
    $region50: #{tpu_custom_call.1} parent=1 // pred_check
      _
    $region51: #{tpu_custom_call.1} parent=1 // pred_check_branch
      %254 = sbr.rel (0) target = $region53
    $region52: #{tpu_custom_call.1} parent=1 // pred_region
      %256 = dma.done [#allocation10], 128
    $region53: #{tpu_custom_call.1} parent=1 // pred_fallthru
      _
    // Predicated region
    $region54: #{tpu_custom_call.1} parent=1 // pred_check
      _
    $region55: #{tpu_custom_call.1} parent=1 // pred_check_branch
      %258 = sbr.rel (0) target = $region57
    $region56: #{tpu_custom_call.1} parent=1 // pred_region
      %260 = dma.done [#allocation13], 128
    $region57: #{tpu_custom_call.1} parent=1 // pred_fallthru
      _
    %261 = vsyncpa [#allocation3], 1
    %262 = vsyncpa [#allocation6], 1
    %263 = vsyncpa [#allocation4], 1
    %264 = vsyncpa [#allocation10], 1
    %265 = vsyncpa [#allocation13], 1

</llo_original>
